<compile_context>
chip_gen: v6e
topology: v6e:2x2x1
jax: 0.10.0
libtpu: 0.0.40
codegen_flags: <defaults>
</compile_context>

<pallas_src>
import functools

import jax
import jax.numpy as jnp
from jax import lax
from jax.experimental import pallas as pl
from jax.experimental.pallas import tpu as pltpu


def _round_up(x, m):
    return (x + m - 1) // m * m


def _fused_mlp_softmax_kernel(x_ref, w12_ref, b12_ref, w3_ref, b3_ref, o_ref,
                              *, out_dim):
    # x arrives unpadded f32 straight from the caller's buffer; cast to bf16
    # for the MXU here (no wrapper pad/cast round-trip through HBM).
    x = x_ref[...].astype(jnp.bfloat16)
    # Fused Linear1+Linear2 (no activation between them in the original
    # module), bf16 operands, f32 accumulation.
    h = jnp.dot(x, w12_ref[...], preferred_element_type=jnp.float32) + b12_ref[...]
    # ReLU after the second Linear, in f32.
    h = jnp.maximum(h, 0.0)
    # Final Linear(hidden -> out_dim); columns padded to 128 lanes so the
    # store is lane-dense (no vst.msk).
    logits = jnp.dot(h.astype(w3_ref.dtype), w3_ref[...],
                     preferred_element_type=jnp.float32) + b3_ref[...]
    n_padded = logits.shape[-1]
    if n_padded > out_dim:
        col = lax.broadcasted_iota(jnp.int32, logits.shape, dimension=1)
        logits = jnp.where(col < out_dim, logits, -jnp.inf)
    # Softmax over the (masked) last dim; divide on the EUP via approx recip.
    m = jnp.max(logits, axis=-1, keepdims=True)
    e = jnp.exp(logits - m)
    s = jnp.sum(e, axis=-1, keepdims=True)
    o_ref[...] = (e * pl.reciprocal(s, approx=True)).astype(o_ref.dtype)


def prepare_fused_params(params):
    """One-time offline weight preparation (fold, pad, cast). Returns
    (fused_param_dict, out_dim)."""
    w1, b1 = params["w1"], params["b1"]
    w2, b2 = params["w2"], params["b2"]
    w3, b3 = params["w3"], params["b3"]
    out_dim = w3.shape[1]
    n_pad = _round_up(max(out_dim, 128), 128)

    # Fold Linear1 + Linear2 in f32 (exact up to fp32 reassociation; there is
    # no activation between them in the original module).
    w12 = jnp.dot(w1, w2, preferred_element_type=jnp.float32)       # (in, hidden)
    b12 = jnp.dot(b1, w2, preferred_element_type=jnp.float32) + b2  # (1, hidden)

    w3_p = jnp.pad(w3, ((0, 0), (0, n_pad - out_dim)))
    b3_p = jnp.pad(b3, ((0, 0), (0, n_pad - out_dim)))

    fused = {
        "w12": w12.astype(jnp.bfloat16),
        "b12": b12.astype(jnp.float32),
        "w3": w3_p.astype(jnp.bfloat16),
        "b3": b3_p.astype(jnp.float32),
    }
    return fused, out_dim


def _choose_batch_tiling(B):
    """Pick (tm, b_pad): tiles up to 512 rows, but >=2 grid steps when
    possible so both v7x TensorCores are used. Rows are multiples of 16 so
    bf16 output blocks stay sublane-aligned."""
    b_min = _round_up(max(B, 1), 16)
    if b_min <= 16:
        return b_min, b_min          # tiny batch: single tile
    tm = min(512, _round_up((b_min + 1) // 2, 16))
    b_pad = _round_up(b_min, tm)
    return tm, b_pad


@functools.partial(jax.jit, static_argnames=("out_dim",))
def minimax_q_forward(x, fused, *, out_dim):
    """x: (B, input_dim) f32; fused: output of prepare_fused_params."""
    B, in_dim = x.shape
    hidden = fused["w12"].shape[1]
    n_pad = fused["w3"].shape[1]

    tm, b_pad = _choose_batch_tiling(B)
    if b_pad > B:
        x = jnp.pad(x, ((0, b_pad - B), (0, 0)))
    num_tiles = b_pad // tm

    kernel = functools.partial(_fused_mlp_softmax_kernel, out_dim=out_dim)

    flops = 2 * b_pad * (in_dim * hidden + hidden * n_pad)
    bytes_accessed = (b_pad * in_dim * 4            # x f32 read
                      + fused["w12"].size * 2 + fused["w3"].size * 2
                      + fused["b12"].size * 4 + fused["b3"].size * 4
                      + b_pad * n_pad * 2)          # bf16 output write

    out_padded = pl.pallas_call(
        kernel,
        out_shape=jax.ShapeDtypeStruct((b_pad, n_pad), jnp.bfloat16),
        grid=(num_tiles,),
        in_specs=[
            pl.BlockSpec((tm, in_dim), lambda i: (i, 0)),      # x tile (pipelined, unpadded)
            pl.BlockSpec((in_dim, hidden), lambda i: (0, 0)),  # fused W12 (VMEM-resident)
            pl.BlockSpec((1, hidden), lambda i: (0, 0)),       # fused b12 (resident)
            pl.BlockSpec((hidden, n_pad), lambda i: (0, 0)),   # W3 (resident)
            pl.BlockSpec((1, n_pad), lambda i: (0, 0)),        # b3 (resident)
        ],
        out_specs=pl.BlockSpec((tm, n_pad), lambda i: (i, 0)),
        compiler_params=pltpu.CompilerParams(
            dimension_semantics=("parallel",)),
        cost_estimate=pl.CostEstimate(
            flops=flops,
            transcendentals=b_pad * n_pad,
            bytes_accessed=bytes_accessed),
    )(x, fused["w12"], fused["b12"], fused["w3"], fused["b3"])

    return out_padded[:B, :out_dim].astype(jnp.float32)


def init_params(key, input_dim=68, hidden_dim=256, output_dim=1):
    """Deterministic synthetic parameters (PyTorch-style uniform fan-in init)."""
    ks = jax.random.split(key, 6)

    def linear(kw, kb, fan_in, fan_out):
        bound = 1.0 / jnp.sqrt(fan_in)
        w = jax.random.uniform(kw, (fan_in, fan_out), jnp.float32, -bound, bound)
        b = jax.random.uniform(kb, (1, fan_out), jnp.float32, -bound, bound)
        return w, b

    w1, b1 = linear(ks[0], ks[1], input_dim, hidden_dim)
    w2, b2 = linear(ks[2], ks[3], hidden_dim, hidden_dim)
    w3, b3 = linear(ks[4], ks[5], hidden_dim, output_dim)
    return {"w1": w1, "b1": b1, "w2": w2, "b2": b2, "w3": w3, "b3": b3}


def reference_forward(x, p):
    """Unfused f32 reference mirroring the PyTorch module."""
    h1 = x @ p["w1"] + p["b1"]
    h2 = jnp.maximum(h1 @ p["w2"] + p["b2"], 0.0)
    logits = h2 @ p["w3"] + p["b3"]
    return jax.nn.softmax(logits, axis=-1)


if __name__ == "__main__":
    key = jax.random.PRNGKey(0)
    k_param, k_x, k_param2, k_x2 = jax.random.split(key, 4)

    # Small shapes consistent with the module defaults.
    B, INPUT_DIM, HIDDEN_DIM, OUTPUT_DIM = 32, 68, 256, 1
    params = init_params(k_param, INPUT_DIM, HIDDEN_DIM, OUTPUT_DIM)
    x = jax.random.normal(k_x, (B, INPUT_DIM), jnp.float32)

    fused, out_dim = prepare_fused_params(params)   # one-time weight fold
    fused = jax.block_until_ready(fused)

    out = minimax_q_forward(x, fused, out_dim=out_dim)
    out = jax.block_until_ready(out)

    ref = reference_forward(x, params)
    assert out.shape == (B, OUTPUT_DIM)
    # Softmax over a single logit -> identically 1.0 (as in the PyTorch module).
    assert jnp.allclose(out, ref, atol=1e-2, rtol=1e-2), "mismatch vs reference (out_dim=1)"

    # Secondary check with output_dim > 1 so the W1@W2 fold + bf16 numerics
    # are actually exercised (the out_dim=1 softmax is vacuously 1.0).
    params2 = init_params(k_param2, INPUT_DIM, HIDDEN_DIM, 8)
    x2 = jax.random.normal(k_x2, (48, INPUT_DIM), jnp.float32)
    fused2, out_dim2 = prepare_fused_params(params2)
    out2 = jax.block_until_ready(minimax_q_forward(x2, fused2, out_dim=out_dim2))
    ref2 = reference_forward(x2, params2)
    assert out2.shape == (48, 8)
    assert jnp.allclose(out2, ref2, atol=2e-2), "mismatch vs reference (out_dim=8)"

    print("KERNEL_OK")
</pallas_src>

<mosaic_0001>
module attributes {stable_mosaic.version = 11 : i64} {
  func.func @_fused_mlp_softmax_kernel(%arg0: i32, %arg1: memref<16x68xf32, #tpu.memory_space<vmem>>, %arg2: memref<68x256xbf16, #tpu.memory_space<vmem>>, %arg3: memref<1x256xf32, #tpu.memory_space<vmem>>, %arg4: memref<256x128xbf16, #tpu.memory_space<vmem>>, %arg5: memref<1x128xf32, #tpu.memory_space<vmem>>, %arg6: memref<16x128xbf16, #tpu.memory_space<vmem>>) attributes {dimension_semantics = [#tpu.dimension_semantics<parallel>], iteration_bounds = array<i64: 2>, scalar_prefetch = 0 : i64, scratch_operands = 0 : i64, tpu.core_type = #tpu.core_type<tc>, window_params = [{transform_indices = @transform_0, window_bounds = array<i64: 16, 68>}, {pipeline_mode = #tpu.pipeline_mode<synchronous>, transform_indices = @transform_1, window_bounds = array<i64: 68, 256>}, {pipeline_mode = #tpu.pipeline_mode<synchronous>, transform_indices = @transform_2, window_bounds = array<i64: 1, 256>}, {pipeline_mode = #tpu.pipeline_mode<synchronous>, transform_indices = @transform_3, window_bounds = array<i64: 256, 128>}, {pipeline_mode = #tpu.pipeline_mode<synchronous>, transform_indices = @transform_4, window_bounds = array<i64: 1, 128>}, {transform_indices = @transform_5, window_bounds = array<i64: 16, 128>}]} {
    %c0 = arith.constant 0 : index
    %c0_0 = arith.constant 0 : index
    %0 = vector.load %arg1[%c0, %c0_0] : memref<16x68xf32, #tpu.memory_space<vmem>>, vector<16x68xf32>
    %1 = arith.truncf %0 : vector<16x68xf32> to vector<16x68xbf16>
    %c0_1 = arith.constant 0 : index
    %c0_2 = arith.constant 0 : index
    %2 = vector.load %arg2[%c0_1, %c0_2] : memref<68x256xbf16, #tpu.memory_space<vmem>>, vector<68x256xbf16>
    %cst = arith.constant dense<0.000000e+00> : vector<16x256xf32>
    %3 = tpu.matmul %1, %2, %cst {dimension_numbers = #tpu.dot_dimension_numbers<[1], [0], [0], [1], [0, 0, 1, 1], [], []>} : vector<16x68xbf16>, vector<68x256xbf16>, vector<16x256xf32> -> vector<16x256xf32>
    %c0_3 = arith.constant 0 : index
    %c0_4 = arith.constant 0 : index
    %4 = vector.load %arg3[%c0_3, %c0_4] : memref<1x256xf32, #tpu.memory_space<vmem>>, vector<1x256xf32>
    %5 = vector.broadcast %4 : vector<1x256xf32> to vector<16x256xf32>
    %6 = arith.addf %3, %5 : vector<16x256xf32>
    %cst_5 = arith.constant 0.000000e+00 : f32
    %7 = vector.broadcast %cst_5 : f32 to vector<16x256xf32>
    %8 = arith.maximumf %6, %7 : vector<16x256xf32>
    %9 = arith.truncf %8 : vector<16x256xf32> to vector<16x256xbf16>
    %c0_6 = arith.constant 0 : index
    %c0_7 = arith.constant 0 : index
    %10 = vector.load %arg4[%c0_6, %c0_7] : memref<256x128xbf16, #tpu.memory_space<vmem>>, vector<256x128xbf16>
    %cst_8 = arith.constant dense<0.000000e+00> : vector<16x128xf32>
    %11 = tpu.matmul %9, %10, %cst_8 {dimension_numbers = #tpu.dot_dimension_numbers<[1], [0], [0], [1], [0, 0, 1, 1], [], []>} : vector<16x256xbf16>, vector<256x128xbf16>, vector<16x128xf32> -> vector<16x128xf32>
    %c0_9 = arith.constant 0 : index
    %c0_10 = arith.constant 0 : index
    %12 = vector.load %arg5[%c0_9, %c0_10] : memref<1x128xf32, #tpu.memory_space<vmem>>, vector<1x128xf32>
    %13 = vector.broadcast %12 : vector<1x128xf32> to vector<16x128xf32>
    %14 = arith.addf %11, %13 : vector<16x128xf32>
    %15 = tpu.iota {dimensions = array<i32: 1>} : vector<16x128xi32>
    %c1_i32 = arith.constant 1 : i32
    %16 = vector.broadcast %c1_i32 : i32 to vector<16x128xi32>
    %17 = arith.cmpi slt, %15, %16 : vector<16x128xi32>
    %cst_11 = arith.constant 0xFF800000 : f32
    %18 = vector.broadcast %cst_11 : f32 to vector<16x128xf32>
    %19 = arith.select %17, %14, %18 : vector<16x128xi1>, vector<16x128xf32>
    %cst_12 = arith.constant dense<0xFF800000> : vector<16xf32>
    %20 = vector.multi_reduction <maximumf>, %19, %cst_12 [1] : vector<16x128xf32> to vector<16xf32>
    %21 = vector.shape_cast %20 : vector<16xf32> to vector<16x1xf32>
    %22 = vector.broadcast %21 : vector<16x1xf32> to vector<16x128xf32>
    %23 = arith.subf %19, %22 : vector<16x128xf32>
    %24 = math.exp %23 : vector<16x128xf32>
    %cst_13 = arith.constant dense<0.000000e+00> : vector<16xf32>
    %25 = vector.multi_reduction <add>, %24, %cst_13 [1] : vector<16x128xf32> to vector<16xf32>
    %26 = vector.shape_cast %25 : vector<16xf32> to vector<16x1xf32>
    %27 = tpu.reciprocal %26 {approx = true} : vector<16x1xf32> -> vector<16x1xf32>
    %28 = vector.broadcast %27 : vector<16x1xf32> to vector<16x128xf32>
    %29 = arith.mulf %24, %28 : vector<16x128xf32>
    %30 = arith.truncf %29 : vector<16x128xf32> to vector<16x128xbf16>
    %c0_14 = arith.constant 0 : index
    %c0_15 = arith.constant 0 : index
    %31 = vector.load %arg6[%c0_14, %c0_15] : memref<16x128xbf16, #tpu.memory_space<vmem>>, vector<16x128xbf16>
    tpu.vector_store %arg6[%c0_14, %c0_15], %30 {strides = array<i32>} : memref<16x128xbf16, #tpu.memory_space<vmem>>, vector<16x128xbf16>,
    return
  }
  func.func @transform_0(%arg0: i32) -> (i32, i32) {
    %c0_i32 = arith.constant 0 : i32
    %c0_i32_0 = arith.constant 0 : i32
    return %arg0, %c0_i32 : i32, i32
  }
  func.func @transform_1(%arg0: i32) -> (i32, i32) {
    %c0_i32 = arith.constant 0 : i32
    %c0_i32_0 = arith.constant 0 : i32
    %c0_i32_1 = arith.constant 0 : i32
    return %c0_i32, %c0_i32_0 : i32, i32
  }
  func.func @transform_2(%arg0: i32) -> (i32, i32) {
    %c0_i32 = arith.constant 0 : i32
    %c0_i32_0 = arith.constant 0 : i32
    %c0_i32_1 = arith.constant 0 : i32
    return %c0_i32, %c0_i32_0 : i32, i32
  }
  func.func @transform_3(%arg0: i32) -> (i32, i32) {
    %c0_i32 = arith.constant 0 : i32
    %c0_i32_0 = arith.constant 0 : i32
    %c0_i32_1 = arith.constant 0 : i32
    return %c0_i32, %c0_i32_0 : i32, i32
  }
  func.func @transform_4(%arg0: i32) -> (i32, i32) {
    %c0_i32 = arith.constant 0 : i32
    %c0_i32_0 = arith.constant 0 : i32
    %c0_i32_1 = arith.constant 0 : i32
    return %c0_i32, %c0_i32_0 : i32, i32
  }
  func.func @transform_5(%arg0: i32) -> (i32, i32) {
    %c0_i32 = arith.constant 0 : i32
    %c0_i32_0 = arith.constant 0 : i32
    return %arg0, %c0_i32 : i32, i32
  }
}

</mosaic_0001>

<llo_original>
// kernel: minimax_q_forward.1
$region0: #{minimax_q_forward.1}
  #allocation0 [shape = 'u32[]', space=smem, size = 0x4, offset = 0x4, fixed_abs, tag = 'smem constant byte address 0x4 - core index']
  #allocation1 [shape = 'u32[144,128]{1,0:T(1,128)}', space=vmem, size = 0x12000, scoped, tag = 'internal scratch']
  %s0 = inlined_call_operand.hbm [shape: f32[32,68], index: 0, kind: input, shape index: {}]
  %s1 = inlined_call_operand.hbm [shape: bf16[68,256], index: 1, kind: input, shape index: {}]
  %s2 = inlined_call_operand.hbm [shape: f32[1,256], index: 2, kind: input, shape index: {}]
  %s3 = inlined_call_operand.hbm [shape: bf16[256,128], index: 3, kind: input, shape index: {}]
  %s4 = inlined_call_operand.vmem [shape: f32[1,128], index: 4, kind: input, shape index: {}]
  %s5 = inlined_call_operand.vmem [shape: bf16[32,128], index: 5, kind: output, shape index: {}]
  %s6 = sld [smem:[#allocation0]]
  $region69: #{minimax_q_forward.1} parent=0
    _
  %s8 = ssub.s32 1, %s6
  %s9 = scalar_select 0, %s8, %s6
  $region1: #{minimax_q_forward.1} parent=0
    #allocation2 [shape = 'u8[16384]{0}', space=vmem, size = 0x4000, scoped, tag = 'input window, operand 0']
    #allocation3 [shape = 's32[2]{0}', space=sflag, size = 0x8, scoped, tag = 'scoped memory for minimax_q_forward.1']
    #allocation4 [shape = 'u8[36864]{0}', space=vmem, size = 0x9000, scoped, tag = 'input window, operand 1, single buffered']
    #allocation5 [shape = 's32[1]{0}', space=sflag, size = 0x4, scoped, tag = 'scoped memory for minimax_q_forward.1']
    #allocation6 [shape = 'u8[1024]{0}', space=vmem, size = 0x400, scoped, tag = 'input window, operand 2, single buffered']
    #allocation7 [shape = 'u8[65536]{0}', space=vmem, size = 0x10000, scoped, tag = 'input window, operand 3, single buffered']
    #allocation8 [shape = 's32[1]{0}', space=sflag, size = 0x4, scoped, tag = 'scoped memory for minimax_q_forward.1']
    %10 = vsyncpa [#allocation3], 0
    %s11 = scalar_lea.sflag [#allocation3], 1
    %12 = vsyncpa %s11, 0
    %13 = vsyncpa [#allocation5], 0
    %14 = vsyncpa [#allocation8], 0
    loop: start=0, step=1, limit=4
    $region2: #{minimax_q_forward.1} parent=1 // loop_pre_header
      _
    $region3: #{minimax_q_forward.1} parent=1 // loop_header
      %s16 = sphi 0, %s20
      %p17 = scmp.ge.s32.totalorder %s16, 4
      %s26 = sphi 0, %s28
      %s29 = sphi 0, %s26
      %s30 = sphi 0, %s29
      %s46 = sphi 0, %s30
      %s50 = sphi 0, %s50
      %s52 = sphi 0, %s50
      %s53 = sphi 0, %s52
      %s67 = sphi 0, %s53
      %s71 = sphi 0, %s71
      %s73 = sphi 0, %s71
      %s74 = sphi 0, %s73
      %s88 = sphi 0, %s74
      %s92 = sphi 0, %s92
      %s94 = sphi 0, %s92
      %s95 = sphi 0, %s94
      %s109 = sphi 0, %s95
      %s113 = sphi 0, %s113
      %s115 = sphi 0, %s113
      %s116 = sphi 0, %s115
      %s130 = sphi 0, %s116
      %s136 = sphi 0, %s138
      %s139 = sphi 0, %s136
      %s140 = sphi 0, %s139
      %s156 = sphi 0, %s140
    $region4: #{minimax_q_forward.1} parent=1 // loop_header_branch
      %19 = sbr.rel (%p17) target = $region8
    $region5: #{minimax_q_forward.1} parent=1 // loop_body
      %s21 = ssub.s32 %s16, 1
      %s22 = ssub.s32 %s16, 2
      %s23 = sadd.s32 %s16, 1
      %s24 = ssub.s32 %s16, %s23
      %p25 = scmp.eq.s32.totalorder %s24, 0
      %s27 = sadd.s32 %s26, 1
      %s28 = scalar_select %p25, %s26, %s27
      %p31 = pneg %p25
      %p32 = scmp.eq.s32.totalorder %s16, 1
      %p33 = por %p31, %p32
      %p34 = scmp.ne.s32.totalorder %s26, %s29
      %p35 = scmp.eq.s32.totalorder %s16, 0
      %p36 = por %p34, %p35
      %p37 = scmp.ne.s32.totalorder %s26, %s29
      %p38 = scmp.eq.s32.totalorder %s21, 1
      %p39 = por %p37, %p38
      %p40 = scmp.ne.s32.totalorder %s29, %s30
      %p41 = scmp.eq.s32.totalorder %s21, 0
      %p42 = por %p40, %p41
      %p43 = scmp.ne.s32.totalorder %s29, %s30
      %p44 = scmp.eq.s32.totalorder %s22, 1
      %p45 = por %p43, %p44
      %p47 = scmp.ne.s32.totalorder %s30, %s46
      %p48 = scmp.eq.s32.totalorder %s22, 0
      %p49 = por %p47, %p48
      %s51 = sadd.s32 %s50, 1
      %p54 = scmp.eq.s32.totalorder %s16, 1
      %p55 = scmp.ne.s32.totalorder %s50, %s52
      %p56 = scmp.eq.s32.totalorder %s16, 0
      %p57 = por %p55, %p56
      %p58 = scmp.ne.s32.totalorder %s50, %s52
      %p59 = scmp.eq.s32.totalorder %s21, 1
      %p60 = por %p58, %p59
      %p61 = scmp.ne.s32.totalorder %s52, %s53
      %p62 = scmp.eq.s32.totalorder %s21, 0
      %p63 = por %p61, %p62
      %p64 = scmp.ne.s32.totalorder %s52, %s53
      %p65 = scmp.eq.s32.totalorder %s22, 1
      %p66 = por %p64, %p65
      %p68 = scmp.ne.s32.totalorder %s53, %s67
      %p69 = scmp.eq.s32.totalorder %s22, 0
      %p70 = por %p68, %p69
      %s72 = sadd.s32 %s71, 1
      %p75 = scmp.eq.s32.totalorder %s16, 1
      %p76 = scmp.ne.s32.totalorder %s71, %s73
      %p77 = scmp.eq.s32.totalorder %s16, 0
      %p78 = por %p76, %p77
      %p79 = scmp.ne.s32.totalorder %s71, %s73
      %p80 = scmp.eq.s32.totalorder %s21, 1
      %p81 = por %p79, %p80
      %p82 = scmp.ne.s32.totalorder %s73, %s74
      %p83 = scmp.eq.s32.totalorder %s21, 0
      %p84 = por %p82, %p83
      %p85 = scmp.ne.s32.totalorder %s73, %s74
      %p86 = scmp.eq.s32.totalorder %s22, 1
      %p87 = por %p85, %p86
      %p89 = scmp.ne.s32.totalorder %s74, %s88
      %p90 = scmp.eq.s32.totalorder %s22, 0
      %p91 = por %p89, %p90
      %s93 = sadd.s32 %s92, 1
      %p96 = scmp.eq.s32.totalorder %s16, 1
      %p97 = scmp.ne.s32.totalorder %s92, %s94
      %p98 = scmp.eq.s32.totalorder %s16, 0
      %p99 = por %p97, %p98
      %p100 = scmp.ne.s32.totalorder %s92, %s94
      %p101 = scmp.eq.s32.totalorder %s21, 1
      %p102 = por %p100, %p101
      %p103 = scmp.ne.s32.totalorder %s94, %s95
      %p104 = scmp.eq.s32.totalorder %s21, 0
      %p105 = por %p103, %p104
      %p106 = scmp.ne.s32.totalorder %s94, %s95
      %p107 = scmp.eq.s32.totalorder %s22, 1
      %p108 = por %p106, %p107
      %p110 = scmp.ne.s32.totalorder %s95, %s109
      %p111 = scmp.eq.s32.totalorder %s22, 0
      %p112 = por %p110, %p111
      %s114 = sadd.s32 %s113, 1
      %p117 = scmp.eq.s32.totalorder %s16, 1
      %p118 = scmp.ne.s32.totalorder %s113, %s115
      %p119 = scmp.eq.s32.totalorder %s16, 0
      %p120 = por %p118, %p119
      %p121 = scmp.ne.s32.totalorder %s113, %s115
      %p122 = scmp.eq.s32.totalorder %s21, 1
      %p123 = por %p121, %p122
      %p124 = scmp.ne.s32.totalorder %s115, %s116
      %p125 = scmp.eq.s32.totalorder %s21, 0
      %p126 = por %p124, %p125
      %p127 = scmp.ne.s32.totalorder %s115, %s116
      %p128 = scmp.eq.s32.totalorder %s22, 1
      %p129 = por %p127, %p128
      %p131 = scmp.ne.s32.totalorder %s116, %s130
      %p132 = scmp.eq.s32.totalorder %s22, 0
      %p133 = por %p131, %p132
      %s134 = ssub.s32 %s16, %s23
      %p135 = scmp.eq.s32.totalorder %s134, 0
      %s137 = sadd.s32 %s136, 1
      %s138 = scalar_select %p135, %s136, %s137
      %p141 = pneg %p135
      %p142 = scmp.eq.s32.totalorder %s16, 1
      %p143 = por %p141, %p142
      %p144 = scmp.ne.s32.totalorder %s136, %s139
      %p145 = scmp.eq.s32.totalorder %s16, 0
      %p146 = por %p144, %p145
      %p147 = scmp.ne.s32.totalorder %s136, %s139
      %p148 = scmp.eq.s32.totalorder %s21, 1
      %p149 = por %p147, %p148
      %p150 = scmp.ne.s32.totalorder %s139, %s140
      %p151 = scmp.eq.s32.totalorder %s21, 0
      %p152 = por %p150, %p151
      %p153 = scmp.ne.s32.totalorder %s139, %s140
      %p154 = scmp.eq.s32.totalorder %s22, 1
      %p155 = por %p153, %p154
      %p157 = scmp.ne.s32.totalorder %s140, %s156
      %p158 = scmp.eq.s32.totalorder %s22, 0
      %p159 = por %p157, %p158
      %p160 = scmp.le.s32.totalorder 1, %s16
      %p161 = scmp.lt.s32.totalorder %s16, 3
      %p162 = pnand %p160, %p161
      %p163 = pneg %p162
      // Predicated region
      $region9: #{minimax_q_forward.1} parent=5 // pred_check
        _
      $region10: #{minimax_q_forward.1} parent=5 // pred_check_branch
        %165 = sbr.rel (%p162) target = $region12
      $region11: #{minimax_q_forward.1} parent=5 // pred_region
        %s166 = ssub.s32 %s16, 1
        // Predicated region
        $region13: #{minimax_q_forward.1} parent=11 // pred_check
          %p167 = pneg %p63
        $region14: #{minimax_q_forward.1} parent=11 // pred_check_branch
          %169 = sbr.rel (%p167) target = $region16
        $region15: #{minimax_q_forward.1} parent=11 // pred_region
          %s171 = ssub.s32 1152, 1152
          %172 = vsyncadd [#allocation5], %s171
          %s173 = sshll.u32 [#allocation4], 4
          %s174 = int_to_ptr.vmem [resolvable:$true] %s173
          %179 = dma.hbm_to_vmem [thread:$0]  %s1, 1152, %s174, [#allocation5], 128, 128, 8
        $region16: #{minimax_q_forward.1} parent=11 // pred_fallthru
          _
        // Predicated region
        $region17: #{minimax_q_forward.1} parent=11 // pred_check
          %p180 = pneg %p84
        $region18: #{minimax_q_forward.1} parent=11 // pred_check_branch
          %182 = sbr.rel (%p180) target = $region20
        $region19: #{minimax_q_forward.1} parent=11 // pred_region
          %s184 = ssub.s32 32, 32
          %185 = vsyncadd [#allocation5], %s184
          %s187 = sshll.u32 [#allocation6], 4
          %s188 = int_to_ptr.vmem [resolvable:$true] %s187
          %190 = dma.hbm_to_vmem [thread:$0]  %s2, 32, %s188, [#allocation5]
        $region20: #{minimax_q_forward.1} parent=11 // pred_fallthru
          _
        // Predicated region
        $region21: #{minimax_q_forward.1} parent=11 // pred_check
          %p191 = pneg %p105
        $region22: #{minimax_q_forward.1} parent=11 // pred_check_branch
          %193 = sbr.rel (%p191) target = $region24
        $region23: #{minimax_q_forward.1} parent=11 // pred_region
          %s195 = ssub.s32 2048, 2048
          %196 = vsyncadd [#allocation8], %s195
          %s197 = sshll.u32 [#allocation7], 4
          %s198 = int_to_ptr.vmem [resolvable:$true] %s197
          %203 = dma.hbm_to_vmem [thread:$0]  %s3, 2048, %s198, [#allocation8], 64, 64, 4
        $region24: #{minimax_q_forward.1} parent=11 // pred_fallthru
          _
        // Predicated region
        $region25: #{minimax_q_forward.1} parent=11 // pred_check
          %p204 = pneg %p126
        $region26: #{minimax_q_forward.1} parent=11 // pred_check_branch
          %206 = sbr.rel (%p204) target = $region28
        $region27: #{minimax_q_forward.1} parent=11 // pred_region
          _
        $region28: #{minimax_q_forward.1} parent=11 // pred_fallthru
          _
      $region12: #{minimax_q_forward.1} parent=5 // pred_fallthru
        _
      %p207 = scmp.lt.s32.totalorder %s16, 2
      // Predicated region
      $region29: #{minimax_q_forward.1} parent=5 // pred_check
        %p208 = pneg %p207
      $region30: #{minimax_q_forward.1} parent=5 // pred_check_branch
        %210 = sbr.rel (%p208) target = $region32
      $region31: #{minimax_q_forward.1} parent=5 // pred_region
        // Predicated region
        $region33: #{minimax_q_forward.1} parent=31 // pred_check
          %p211 = pneg %p36
        $region34: #{minimax_q_forward.1} parent=31 // pred_check_branch
          %213 = sbr.rel (%p211) target = $region36
        $region35: #{minimax_q_forward.1} parent=31 // pred_region
          %s214 = sand.u32 %s26, 1
          %s215 = scalar_lea.sflag [#allocation3], %s214
          %s216 = sand.u32 %s26, 1
          %s217 = smul.addr %s216, 16
          %s218 = scalar_lea.vmem [#allocation2], %s217
          %s219 = smul.u32 2, %s16
          %s221 = ssub.s32 256, 256
          %222 = vsyncadd %s215, %s221
          %s223 = smul.addr %s219, 128
          %s224 = scalar_lea.hbm %s0, %s223
          %s225 = sshll.u32 %s218, 4
          %s226 = int_to_ptr.vmem [resolvable:$true] %s225
          %231 = dma.hbm_to_vmem [thread:$0]  %s224, 256, %s226, %s215, 128, 128, 8
        $region36: #{minimax_q_forward.1} parent=31 // pred_fallthru
          _
      $region32: #{minimax_q_forward.1} parent=5 // pred_fallthru
        _
      %p232 = scmp.le.s32.totalorder 1, %s16
      %p233 = scmp.lt.s32.totalorder %s16, 3
      %p234 = pnand %p232, %p233
      %p235 = pneg %p234
      // Predicated region
      $region37: #{minimax_q_forward.1} parent=5 // pred_check
        _
      $region38: #{minimax_q_forward.1} parent=5 // pred_check_branch
        %237 = sbr.rel (%p234) target = $region40
      $region39: #{minimax_q_forward.1} parent=5 // pred_region
        %s238 = ssub.s32 %s16, 1
        %s239 = sand.u32 %s29, 1
        %s240 = scalar_lea.sflag [#allocation3], %s239
        %s241 = sand.u32 %s29, 1
        %s242 = smul.addr %s241, 16
        %s243 = scalar_lea.vmem [#allocation2], %s242
        // Predicated region
        $region41: #{minimax_q_forward.1} parent=39 // pred_check
          %p244 = pneg %p42
        $region42: #{minimax_q_forward.1} parent=39 // pred_check_branch
          %246 = sbr.rel (%p244) target = $region44
        $region43: #{minimax_q_forward.1} parent=39 // pred_region
          %247 = dma.done %s240, 256
        $region44: #{minimax_q_forward.1} parent=39 // pred_fallthru
          _
        // Predicated region
        $region45: #{minimax_q_forward.1} parent=39 // pred_check
          %p248 = pneg %p63
        $region46: #{minimax_q_forward.1} parent=39 // pred_check_branch
          %250 = sbr.rel (%p248) target = $region48
        $region47: #{minimax_q_forward.1} parent=39 // pred_region
          %251 = dma.done [#allocation5], 1152
        $region48: #{minimax_q_forward.1} parent=39 // pred_fallthru
          _
        // Predicated region
        $region49: #{minimax_q_forward.1} parent=39 // pred_check
          %p252 = pneg %p84
        $region50: #{minimax_q_forward.1} parent=39 // pred_check_branch
          %254 = sbr.rel (%p252) target = $region52
        $region51: #{minimax_q_forward.1} parent=39 // pred_region
          %255 = dma.done [#allocation5], 32
        $region52: #{minimax_q_forward.1} parent=39 // pred_fallthru
          _
        // Predicated region
        $region53: #{minimax_q_forward.1} parent=39 // pred_check
          %p256 = pneg %p105
        $region54: #{minimax_q_forward.1} parent=39 // pred_check_branch
          %258 = sbr.rel (%p256) target = $region56
        $region55: #{minimax_q_forward.1} parent=39 // pred_region
          %259 = dma.done [#allocation8], 2048
        $region56: #{minimax_q_forward.1} parent=39 // pred_fallthru
          _
        %s260 = sand.u32 %s29, 1
        %s261 = scalar_lea.sflag [#allocation3], %s260
        %s262 = sand.u32 %s29, 1
        %s263 = smul.addr %s262, 16
        %s264 = scalar_lea.vmem [#allocation2], %s263
        %p265 = pneg %p42
        %p266 = pneg %p39
        %p267 = pneg %p63
        %p268 = pneg %p60
        %p269 = pneg %p84
        %p270 = pneg %p81
        %p271 = pneg %p105
        %p272 = pneg %p102
        %p273 = pneg %p126
        %p274 = pneg %p123
        %p275 = pneg %p152
        %p276 = pneg %p149
        %s277 = smul.u32 2, %s21
        %p278 = scmp.lt.s32.totalorder %s277, 3
        %s279 = scalar_select %p278, %s277, 3
        %s280 = smul.addr %s279, 4
        %s281 = scalar_lea.vmem %s5, %s280
        %s282 = smul.u32 2, %s21
        %s283 = smul.u32 2, %s21
        %p284 = scmp.lt.s32.totalorder %s283, 3
        %s285 = scalar_select %p284, %s283, 3
        %s286 = smul.addr %s285, 4
        %s287 = scalar_lea.vmem %s5, %s286
        %s288 = smul.u32 2, %s21
        %v290 = vld [vmem:[%s243] sm:$0xff]
        %v291 = vld [vmem:[%s243 + $0x8] sm:$0xff]
        %v292 = vpack.c.bf16 %v291, %v290
        %v293 = vld [vmem:[#allocation4] sm:$0xff]
        %v294 = vld [vmem:[#allocation4 + $0x8] sm:$0xff]
        %v295 = vld [vmem:[#allocation4 + $0x10] sm:$0xff]
        %v296 = vld [vmem:[#allocation4 + $0x18] sm:$0xff]
        %v297 = vld [vmem:[#allocation4 + $0x20] sm:$0xff]
        %v298 = vld [vmem:[#allocation4 + $0x28] sm:$0xff]
        %v299 = vld [vmem:[#allocation4 + $0x30] sm:$0xff]
        %v300 = vld [vmem:[#allocation4 + $0x38] sm:$0xff]
        %v301 = vld [vmem:[#allocation4 + $0x40] sm:$0x33]
        %v302 = vld [vmem:[#allocation6] sm:$0x3]
        %v304 = vlaneseq
        %v305 = vshrl.u32 %v304, 7
        %v306 = vsub.s32 0, %v305
        %v307 = vrot.slane %v302, %v306
        %v308 = vlaneseq
        %v309 = vshrl.u32 %v308, 7
        %v310 = vsub.s32 1, %v309
        %v311 = vrot.slane %v302, %v310
        %v323 = vunpack.c.l.b16 %v293
        %v324 = vunpack.c.h.b16 %v293
        %v325 = vunpack.c.l.b16 %v294
        %v326 = vunpack.c.h.b16 %v294
        %v327 = vunpack.c.l.b16 %v295
        %v328 = vunpack.c.h.b16 %v295
        %v329 = vunpack.c.l.b16 %v296
        %v330 = vunpack.c.h.b16 %v296
        %v331 = vunpack.c.l.b16 %v297
        %v332 = vunpack.c.h.b16 %v297
        %v333 = vunpack.c.l.b16 %v298
        %v334 = vunpack.c.h.b16 %v298
        %v335 = vunpack.c.l.b16 %v299
        %v336 = vunpack.c.h.b16 %v299
        %v337 = vunpack.c.l.b16 %v300
        %v338 = vunpack.c.h.b16 %v300
        %v339 = vunpack.c.l.b16 %v301
        %v340 = vunpack.c.h.b16 %v301
        %v341 = vpack.c.b16 %v325, %v323
        %v342 = vpack.c.b16 %v326, %v324
        %v343 = vpack.c.b16 %v329, %v327
        %v344 = vpack.c.b16 %v330, %v328
        %v345 = vpack.c.b16 %v333, %v331
        %v346 = vpack.c.b16 %v334, %v332
        %v347 = vpack.c.b16 %v337, %v335
        %v348 = vpack.c.b16 %v338, %v336
        %v349 = vpack.c.b16 %v339, %v339
        %v350 = vpack.c.b16 %v340, %v340
        %vm359 = vcmask 556032
        %v361 = vsel %vm359, %v292, 0
        %vm363 = vcmask 1041408
        %v365 = vsel %vm363, %v349, 0
        %v368 = vsel %vm363, %v350, 0
        %370 = vmatprep.subr.bf16.mxu0 0
        %371 = vmatpush1.bf16.msra.mxu0 0
        %372 = vmatprep.subr.bf16.mxu0 0
        %373 = vmatpush1.bf16.msra.mxu0 0
        %374 = vmatprep.subr.bf16.mxu0 0
        %375 = vmatpush1.bf16.msra.mxu0 0
        %376 = vmatprep.subr.bf16.mxu0 %v368
        %377 = vmatpush1.bf16.msra.mxu0 %v365
        %378 = vmatprep.subr.bf16.mxu0 %v348
        %379 = vmatpush1.bf16.msra.mxu0 %v347
        %380 = vmatprep.subr.bf16.mxu0 %v346
        %381 = vmatpush1.bf16.msra.mxu0 %v345
        %382 = vmatprep.subr.bf16.mxu0 %v344
        %383 = vmatpush1.bf16.msra.mxu0 %v343
        %384 = vmatprep.subr.bf16.mxu0 %v342
        %385 = vmatpush1.bf16.msra.mxu0 %v341
        %386 = vmatprep.subr.bf16.mxu0 0
        %387 = vmatpush2.bf16.msra.mxu0 0
        %388 = vmatprep.subr.bf16.mxu0 0
        %389 = vmatpush2.bf16.msra.mxu0 0
        %390 = vmatprep.subr.bf16.mxu0 0
        %391 = vmatpush2.bf16.msra.mxu0 0
        %392 = vmatprep.subr.bf16.mxu0 0
        %393 = vmatpush2.bf16.msra.mxu0 0
        %394 = vmatprep.subr.bf16.mxu0 0
        %395 = vmatpush2.bf16.msra.mxu0 0
        %396 = vmatprep.subr.bf16.mxu0 0
        %397 = vmatpush2.bf16.msra.mxu0 0
        %398 = vmatprep.subr.bf16.mxu0 0
        %399 = vmatpush2.bf16.msra.mxu0 0
        %400 = vmatprep.subr.bf16.mxu0 0
        %401 = vmatpush2.bf16.msra.mxu0 0
        %402 = vmatprep.mubr.bf16.mxu0 0
        %403 = vmatmul.mubr.bf16.gmra.mxu0 %v361
        %v404 = vpop.f32.mrf.mxu0
        %v405 = vadd.f32 %v307, %v404
        %v406 = vpop.f32.mrf.mxu0
        %v407 = vadd.f32 %v311, %v406
        %v408 = vpop.f32.mrf.mxu0
        %v409 = vadd.f32 %v307, %v408
        %v410 = vpop.f32.mrf.mxu0
        %v411 = vadd.f32 %v311, %v410
        %412 = vdwg.mxu0
        %v413 = vmax.f32 %v405, 0.0
        %v414 = vmax.f32 %v407, 0.0
        %v415 = vmax.f32 %v409, 0.0
        %v416 = vmax.f32 %v411, 0.0
        %v417 = vpack.c.bf16 %v415, %v413
        %v418 = vpack.c.bf16 %v416, %v414
        %v419 = vld [vmem:[#allocation7] sm:$0xf]
        %v420 = vld [vmem:[#allocation7 + $0x4] sm:$0xf]
        %v421 = vld [vmem:[#allocation7 + $0x8] sm:$0xf]
        %v422 = vld [vmem:[#allocation7 + $0xc] sm:$0xf]
        %v423 = vld [vmem:[#allocation7 + $0x10] sm:$0xf]
        %v424 = vld [vmem:[#allocation7 + $0x14] sm:$0xf]
        %v425 = vld [vmem:[#allocation7 + $0x18] sm:$0xf]
        %v426 = vld [vmem:[#allocation7 + $0x1c] sm:$0xf]
        %v427 = vld [vmem:[#allocation7 + $0x20] sm:$0xf]
        %v428 = vld [vmem:[#allocation7 + $0x24] sm:$0xf]
        %v429 = vld [vmem:[#allocation7 + $0x28] sm:$0xf]
        %v430 = vld [vmem:[#allocation7 + $0x2c] sm:$0xf]
        %v431 = vld [vmem:[#allocation7 + $0x30] sm:$0xf]
        %v432 = vld [vmem:[#allocation7 + $0x34] sm:$0xf]
        %v433 = vld [vmem:[#allocation7 + $0x38] sm:$0xf]
        %v434 = vld [vmem:[#allocation7 + $0x3c] sm:$0xf]
        %v435 = vld [vmem:[#allocation7 + $0x40] sm:$0xf]
        %v436 = vld [vmem:[#allocation7 + $0x44] sm:$0xf]
        %v437 = vld [vmem:[#allocation7 + $0x48] sm:$0xf]
        %v438 = vld [vmem:[#allocation7 + $0x4c] sm:$0xf]
        %v439 = vld [vmem:[#allocation7 + $0x50] sm:$0xf]
        %v440 = vld [vmem:[#allocation7 + $0x54] sm:$0xf]
        %v441 = vld [vmem:[#allocation7 + $0x58] sm:$0xf]
        %v442 = vld [vmem:[#allocation7 + $0x5c] sm:$0xf]
        %v443 = vld [vmem:[#allocation7 + $0x60] sm:$0xf]
        %v444 = vld [vmem:[#allocation7 + $0x64] sm:$0xf]
        %v445 = vld [vmem:[#allocation7 + $0x68] sm:$0xf]
        %v446 = vld [vmem:[#allocation7 + $0x6c] sm:$0xf]
        %v447 = vld [vmem:[#allocation7 + $0x70] sm:$0xf]
        %v448 = vld [vmem:[#allocation7 + $0x74] sm:$0xf]
        %v449 = vld [vmem:[#allocation7 + $0x78] sm:$0xf]
        %v450 = vld [vmem:[#allocation7 + $0x7c] sm:$0xf]
        %v451 = vld [vmem:[%s4] sm:$0x1]
        %v453 = vlaneseq
        %v454 = vshrl.u32 %v453, 7
        %v455 = vsub.s32 0, %v454
        %v456 = vrot.slane %v451, %v455
        %v490 = vunpack.c.l.b16 %v419
        %v491 = vunpack.c.l.b16 %v420
        %v492 = vunpack.c.l.b16 %v421
        %v493 = vunpack.c.l.b16 %v422
        %v494 = vunpack.c.l.b16 %v423
        %v495 = vunpack.c.l.b16 %v424
        %v496 = vunpack.c.l.b16 %v425
        %v497 = vunpack.c.l.b16 %v426
        %v498 = vunpack.c.l.b16 %v427
        %v499 = vunpack.c.l.b16 %v428
        %v500 = vunpack.c.l.b16 %v429
        %v501 = vunpack.c.l.b16 %v430
        %v502 = vunpack.c.l.b16 %v431
        %v503 = vunpack.c.l.b16 %v432
        %v504 = vunpack.c.l.b16 %v433
        %v505 = vunpack.c.l.b16 %v434
        %v506 = vunpack.c.l.b16 %v435
        %v507 = vunpack.c.l.b16 %v436
        %v508 = vunpack.c.l.b16 %v437
        %v509 = vunpack.c.l.b16 %v438
        %v510 = vunpack.c.l.b16 %v439
        %v511 = vunpack.c.l.b16 %v440
        %v512 = vunpack.c.l.b16 %v441
        %v513 = vunpack.c.l.b16 %v442
        %v514 = vunpack.c.l.b16 %v443
        %v515 = vunpack.c.l.b16 %v444
        %v516 = vunpack.c.l.b16 %v445
        %v517 = vunpack.c.l.b16 %v446
        %v518 = vunpack.c.l.b16 %v447
        %v519 = vunpack.c.l.b16 %v448
        %v520 = vunpack.c.l.b16 %v449
        %v521 = vunpack.c.l.b16 %v450
        %v522 = vpack.c.b16 %v491, %v490
        %v523 = vpack.c.b16 %v493, %v492
        %v524 = vpack.c.b16 %v495, %v494
        %v525 = vpack.c.b16 %v497, %v496
        %v526 = vpack.c.b16 %v499, %v498
        %v527 = vpack.c.b16 %v501, %v500
        %v528 = vpack.c.b16 %v503, %v502
        %v529 = vpack.c.b16 %v505, %v504
        %v530 = vpack.c.b16 %v507, %v506
        %v531 = vpack.c.b16 %v509, %v508
        %v532 = vpack.c.b16 %v511, %v510
        %v533 = vpack.c.b16 %v513, %v512
        %v534 = vpack.c.b16 %v515, %v514
        %v535 = vpack.c.b16 %v517, %v516
        %v536 = vpack.c.b16 %v519, %v518
        %v537 = vpack.c.b16 %v521, %v520
        %554 = vmatprep.subr.bf16.mxu0 0
        %555 = vmatpush1.bf16.msra.mxu0 %v529
        %556 = vmatprep.subr.bf16.mxu0 0
        %557 = vmatpush1.bf16.msra.mxu0 %v528
        %558 = vmatprep.subr.bf16.mxu0 0
        %559 = vmatpush1.bf16.msra.mxu0 %v527
        %560 = vmatprep.subr.bf16.mxu0 0
        %561 = vmatpush1.bf16.msra.mxu0 %v526
        %562 = vmatprep.subr.bf16.mxu0 0
        %563 = vmatpush1.bf16.msra.mxu0 %v525
        %564 = vmatprep.subr.bf16.mxu0 0
        %565 = vmatpush1.bf16.msra.mxu0 %v524
        %566 = vmatprep.subr.bf16.mxu0 0
        %567 = vmatpush1.bf16.msra.mxu0 %v523
        %568 = vmatprep.subr.bf16.mxu0 0
        %569 = vmatpush1.bf16.msra.mxu0 %v522
        %570 = vmatprep.subr.bf16.mxu0 0
        %571 = vmatpush2.bf16.msra.mxu0 %v537
        %572 = vmatprep.subr.bf16.mxu0 0
        %573 = vmatpush2.bf16.msra.mxu0 %v536
        %574 = vmatprep.subr.bf16.mxu0 0
        %575 = vmatpush2.bf16.msra.mxu0 %v535
        %576 = vmatprep.subr.bf16.mxu0 0
        %577 = vmatpush2.bf16.msra.mxu0 %v534
        %578 = vmatprep.subr.bf16.mxu0 0
        %579 = vmatpush2.bf16.msra.mxu0 %v533
        %580 = vmatprep.subr.bf16.mxu0 0
        %581 = vmatpush2.bf16.msra.mxu0 %v532
        %582 = vmatprep.subr.bf16.mxu0 0
        %583 = vmatpush2.bf16.msra.mxu0 %v531
        %584 = vmatprep.subr.bf16.mxu0 0
        %585 = vmatpush2.bf16.msra.mxu0 %v530
        %586 = vmatprep.mubr.bf16.mxu0 %v418
        %587 = vmatmul.mubr.bf16.gmra.mxu0 %v417
        %v588 = vpop.f32.mrf.mxu0
        %v589 = vadd.f32 %v456, %v588
        %v590 = vpop.f32.mrf.mxu0
        %v591 = vpop.f32.mrf.mxu0
        %v592 = vadd.f32 %v456, %v591
        %v593 = vpop.f32.mrf.mxu0
        %594 = vdwg.mxu0
        %v595 = vlaneseq
        %v596 = vand.u32 %v595, 127
        %vm597 = vcmp.lt.s32.totalorder %v596, 1
        %v598 = vsel %vm597, %v589, -inf
        %v599 = vsel %vm597, %v592, -inf
        %600 = vmax.xlane.f32.xlu0 %v598
        %v601 = vpop.xlane.xlu0 %600
        %602 = vmax.xlane.f32.xlu0 %v599
        %v603 = vpop.xlane.xlu0 %602
        %v604 = vsub.f32 %v598, %v601
        %v605 = vsub.f32 %v599, %v603
        %v606 = vmul.f32 %v604, 1.442695
        %v607 = vpow.pop %v606
        %v608 = vmul.f32 %v605, 1.442695
        %v609 = vpow.pop %v608
        %610 = vadd.xlane.f32.xlu0 %v607
        %v611 = vpop.xlane.xlu0 %610
        %612 = vadd.xlane.f32.xlu0 %v609
        %v613 = vpop.xlane.xlu0 %612
        %v614 = vrcp.pop %v611
        %v615 = vrcp.pop %v613
        %v616 = vmul.f32 %v607, %v614
        %v617 = vmul.f32 %v609, %v615
        %v618 = vpack.c.bf16 %v617, %v616
        %v620 = vunpack.c.l.b16 %v618
        %v621 = vunpack.c.h.b16 %v618
        %v622 = vpack.c.b16 %v620, %v620
        %v623 = vpack.c.b16 %v621, %v621
        %626 = vst [vmem:[%s287] sm:$0xf] %v622
        %627 = vst [vmem:[%s287 + $0x4] sm:$0xf] %v623
        %s628 = smul.u32 2, %s21
        %p629 = scmp.lt.s32.totalorder %s628, 3
        %s630 = scalar_select %p629, %s628, 3
        %s631 = smul.addr %s630, 4
        %s632 = scalar_lea.vmem %s5, %s631
        // Predicated region
        $region57: #{minimax_q_forward.1} parent=39 // pred_check
          %p633 = pneg %p149
        $region58: #{minimax_q_forward.1} parent=39 // pred_check_branch
          %635 = sbr.rel (%p633) target = $region60
        $region59: #{minimax_q_forward.1} parent=39 // pred_region
          %s636 = smul.u32 2, %s21
        $region60: #{minimax_q_forward.1} parent=39 // pred_fallthru
          _
      $region40: #{minimax_q_forward.1} parent=5 // pred_fallthru
        _
      %p637 = scmp.le.s32.totalorder 2, %s16
      // Predicated region
      $region61: #{minimax_q_forward.1} parent=5 // pred_check
        %p638 = pneg %p637
      $region62: #{minimax_q_forward.1} parent=5 // pred_check_branch
        %640 = sbr.rel (%p638) target = $region64
      $region63: #{minimax_q_forward.1} parent=5 // pred_region
        %s641 = ssub.s32 %s16, 2
        // Predicated region
        $region65: #{minimax_q_forward.1} parent=63 // pred_check
          %p642 = pneg %p155
        $region66: #{minimax_q_forward.1} parent=63 // pred_check_branch
          %644 = sbr.rel (%p642) target = $region68
        $region67: #{minimax_q_forward.1} parent=63 // pred_region
          %s645 = smul.u32 2, %s22
          %p646 = scmp.lt.s32.totalorder %s645, 3
          %s647 = scalar_select %p646, %s645, 3
          %s648 = smul.addr %s647, 4
          %s649 = scalar_lea.vmem %s5, %s648
        $region68: #{minimax_q_forward.1} parent=63 // pred_fallthru
          _
      $region64: #{minimax_q_forward.1} parent=5 // pred_fallthru
        _
    $region6: #{minimax_q_forward.1} parent=1 // loop_footer
      %s20 = sadd.s32 1, %s16
    $region7: #{minimax_q_forward.1} parent=1 // loop_footer_branch
      %15 = sbr.rel target = $region3
    $region8: #{minimax_q_forward.1} parent=1 // loop_exit
      _
    %650 = vsyncpa [#allocation3], 1
    %s651 = scalar_lea.sflag [#allocation3], 1
    %652 = vsyncpa %s651, 1
    %653 = vsyncpa [#allocation5], 1
    %654 = vsyncpa [#allocation8], 1

</llo_original>
